<compile_context>
chip_gen: v5e
topology: v5e:2x2
jax: 0.10.0
libtpu: 0.0.40
codegen_flags: <defaults>
</compile_context>

<pallas_src>
import functools
import math

import jax
import jax.numpy as jnp
from jax.experimental import pallas as pl
from jax.experimental.pallas import tpu as pltpu

LN_EPS = 1e-5  # torch.nn.LayerNorm default


def _round_up(x: int, m: int) -> int:
    return ((x + m - 1) // m) * m


def _gate_add_norm_kernel(x_ref, r_ref, w_ref, b_ref, gamma_ref, beta_ref,
                          o_ref, *, d_out, d_out_pad):
    # x_ref:     (tile_n, d_in_pad)        matmul dtype (bf16)
    # r_ref:     (tile_n, d_out_pad)       residual (original dtype)
    # w_ref:     (d_in_pad, 2*d_out_pad)   fused [W1 | W2], matmul dtype
    # b_ref:     (1, 2*d_out_pad)          fused [b1 | b2], f32
    # gamma/beta:(1, d_out_pad)            f32 (zero-padded)
    x = x_ref[...]
    w = w_ref[...]

    # One fused MXU matmul (x fed to the systolic array once), f32 accumulate.
    vg = jnp.dot(x, w, preferred_element_type=jnp.float32) + b_ref[...]
    val = vg[:, :d_out_pad]
    gate = vg[:, d_out_pad:]

    # GLU gating + residual add, all in f32.  Padded columns are exactly 0
    # (zero-padded weights/biases/residual => 0 * sigmoid(0) + 0 = 0).
    y = val * jax.nn.sigmoid(gate)
    z = y + r_ref[...].astype(jnp.float32)

    # LayerNorm over the REAL d_out features (padded columns contribute 0 to
    # the sum; mask them out of the variance).
    inv_d = jnp.float32(1.0 / d_out)
    mean = jnp.sum(z, axis=-1, keepdims=True) * inv_d
    centered = z - mean
    if d_out != d_out_pad:
        lane = jax.lax.broadcasted_iota(jnp.int32, z.shape, dimension=1)
        centered = jnp.where(lane < d_out, centered, 0.0)
    var = jnp.sum(centered * centered, axis=-1, keepdims=True) * inv_d
    normed = centered * jax.lax.rsqrt(var + LN_EPS)
    out = normed * gamma_ref[...] + beta_ref[...]

    o_ref[...] = out.astype(o_ref.dtype)


def gate_add_norm(x, residual, params, *, tile_n=512,
                  matmul_dtype=jnp.bfloat16):
    """x: (..., d_in), residual: (..., d_out) -> (..., d_out)."""
    w1, b1, w2, b2, gamma, beta = (params[k] for k in
                                   ("w1", "b1", "w2", "b2", "gamma", "beta"))
    d_in = x.shape[-1]
    d_out = residual.shape[-1]
    lead_shape = x.shape[:-1]
    n = int(math.prod(lead_shape)) if lead_shape else 1

    # Lane-dense feature padding (multiples of 128).
    d_in_pad = _round_up(d_in, 128)
    d_out_pad = _round_up(d_out, 128)

    # Row tile: multiple of 8 sublanes (128-multiple for big N keeps the MXU
    # M-dim full); pad N up to a whole number of tiles.
    if n < tile_n:
        tile_n = _round_up(n, 8)
    n_pad = _round_up(n, tile_n)
    num_tiles = n_pad // tile_n

    # --- Wrapper-side packing (pure layout plumbing, done once per call). ---
    x2 = jnp.pad(x.reshape(n, d_in).astype(matmul_dtype),
                 ((0, n_pad - n), (0, d_in_pad - d_in)))
    r2 = jnp.pad(residual.reshape(n, d_out),
                 ((0, n_pad - n), (0, d_out_pad - d_out)))

    w1p = jnp.pad(w1.astype(matmul_dtype),
                  ((0, d_in_pad - d_in), (0, d_out_pad - d_out)))
    w2p = jnp.pad(w2.astype(matmul_dtype),
                  ((0, d_in_pad - d_in), (0, d_out_pad - d_out)))
    w_fused = jnp.concatenate([w1p, w2p], axis=1)          # (d_in_pad, 2*d_out_pad)

    b1p = jnp.pad(b1.astype(jnp.float32), (0, d_out_pad - d_out))
    b2p = jnp.pad(b2.astype(jnp.float32), (0, d_out_pad - d_out))
    b_fused = jnp.concatenate([b1p, b2p]).reshape(1, 2 * d_out_pad)

    g2 = jnp.pad(gamma.astype(jnp.float32), (0, d_out_pad - d_out)).reshape(1, d_out_pad)
    bt2 = jnp.pad(beta.astype(jnp.float32), (0, d_out_pad - d_out)).reshape(1, d_out_pad)

    kernel = functools.partial(_gate_add_norm_kernel,
                               d_out=d_out, d_out_pad=d_out_pad)

    out = pl.pallas_call(
        kernel,
        out_shape=jax.ShapeDtypeStruct((n_pad, d_out_pad), x.dtype),
        grid=(num_tiles,),
        in_specs=[
            # Row-tiled, double-buffered streams.
            pl.BlockSpec((tile_n, d_in_pad), lambda i: (i, 0)),     # x
            pl.BlockSpec((tile_n, d_out_pad), lambda i: (i, 0)),    # residual
            # Grid-invariant (constant block index -> fetched once, resident).
            pl.BlockSpec((d_in_pad, 2 * d_out_pad), lambda i: (0, 0)),  # W fused
            pl.BlockSpec((1, 2 * d_out_pad), lambda i: (0, 0)),         # b fused
            pl.BlockSpec((1, d_out_pad), lambda i: (0, 0)),             # gamma
            pl.BlockSpec((1, d_out_pad), lambda i: (0, 0)),             # beta
        ],
        out_specs=pl.BlockSpec((tile_n, d_out_pad), lambda i: (i, 0)),
        compiler_params=pltpu.CompilerParams(
            # Rows are independent -> megacore-shard the grid on v7x.
            dimension_semantics=("parallel",)),
    )(x2, r2, w_fused, b_fused, g2, bt2)

    return out[:n, :d_out].reshape(*lead_shape, d_out)


def init_params(key, input_dim, output_dim, dtype=jnp.float32):
    k1, k2, k3, k4 = jax.random.split(key, 4)
    scale = 1.0 / jnp.sqrt(jnp.array(input_dim, dtype))
    return {
        "w1": jax.random.normal(k1, (input_dim, output_dim), dtype) * scale,
        "b1": jax.random.normal(k2, (output_dim,), dtype) * 0.01,
        "w2": jax.random.normal(k3, (input_dim, output_dim), dtype) * scale,
        "b2": jax.random.normal(k4, (output_dim,), dtype) * 0.01,
        "gamma": jnp.ones((output_dim,), dtype),   # LayerNorm weight init
        "beta": jnp.zeros((output_dim,), dtype),   # LayerNorm bias init
    }


def _reference(x, residual, params, matmul_dtype=None):
    """Pure-JAX reference mirroring the PyTorch forward.

    If matmul_dtype is given, the matmul inputs are cast to it (with f32
    accumulation), mirroring the kernel's MXU precision.
    """
    w1, w2, xm = params["w1"], params["w2"], x
    if matmul_dtype is not None:
        xm = x.astype(matmul_dtype)
        w1 = w1.astype(matmul_dtype)
        w2 = w2.astype(matmul_dtype)
    val = jnp.dot(xm, w1, preferred_element_type=jnp.float32) + params["b1"]
    gate = jnp.dot(xm, w2, preferred_element_type=jnp.float32) + params["b2"]
    y = val * jax.nn.sigmoid(gate)
    z = y + residual
    mean = jnp.mean(z, axis=-1, keepdims=True)
    var = jnp.mean((z - mean) ** 2, axis=-1, keepdims=True)
    return (z - mean) * jax.lax.rsqrt(var + LN_EPS) * params["gamma"] + params["beta"]


if __name__ == "__main__":
    batch, seq, input_dim, output_dim = 2, 8, 32, 32

    key = jax.random.PRNGKey(0)
    kx, kr, kp = jax.random.split(key, 3)
    x = jax.random.normal(kx, (batch, seq, input_dim), jnp.float32)
    residual = jax.random.normal(kr, (batch, seq, output_dim), jnp.float32)
    params = init_params(kp, input_dim, output_dim)

    out = gate_add_norm(x, residual, params)
    out = jax.block_until_ready(out)
    assert out.shape == (batch, seq, output_dim)

    # Tight check against a reference with the same (bf16-in / f32-acc) matmul
    # precision as the kernel.
    ref_mirror = _reference(x, residual, params, matmul_dtype=jnp.bfloat16)
    assert jnp.allclose(out, ref_mirror, atol=1e-3, rtol=1e-3), \
        "mismatch vs precision-mirrored reference"

    # Looser check against the full-f32 reference (bf16 matmul rounding only).
    ref_f32 = _reference(x, residual, params)
    assert jnp.allclose(out, ref_f32, atol=5e-2, rtol=5e-2), \
        "mismatch vs f32 reference"

    print("KERNEL_OK")
</pallas_src>

<mosaic_0001>
module attributes {stable_mosaic.version = 11 : i64} {
  func.func @_gate_add_norm_kernel(%arg0: i32, %arg1: memref<16x128xbf16, #tpu.memory_space<vmem>>, %arg2: memref<16x128xf32, #tpu.memory_space<vmem>>, %arg3: memref<128x256xbf16, #tpu.memory_space<vmem>>, %arg4: memref<1x256xf32, #tpu.memory_space<vmem>>, %arg5: memref<1x128xf32, #tpu.memory_space<vmem>>, %arg6: memref<1x128xf32, #tpu.memory_space<vmem>>, %arg7: memref<16x128xf32, #tpu.memory_space<vmem>>) attributes {dimension_semantics = [#tpu.dimension_semantics<parallel>], iteration_bounds = array<i64: 1>, scalar_prefetch = 0 : i64, scratch_operands = 0 : i64, tpu.core_type = #tpu.core_type<tc>, window_params = [{transform_indices = @transform_0, window_bounds = array<i64: 16, 128>}, {transform_indices = @transform_1, window_bounds = array<i64: 16, 128>}, {pipeline_mode = #tpu.pipeline_mode<synchronous>, transform_indices = @transform_2, window_bounds = array<i64: 128, 256>}, {pipeline_mode = #tpu.pipeline_mode<synchronous>, transform_indices = @transform_3, window_bounds = array<i64: 1, 256>}, {pipeline_mode = #tpu.pipeline_mode<synchronous>, transform_indices = @transform_4, window_bounds = array<i64: 1, 128>}, {pipeline_mode = #tpu.pipeline_mode<synchronous>, transform_indices = @transform_5, window_bounds = array<i64: 1, 128>}, {transform_indices = @transform_6, window_bounds = array<i64: 16, 128>}]} {
    %c0 = arith.constant 0 : index
    %c0_0 = arith.constant 0 : index
    %0 = vector.load %arg1[%c0, %c0_0] : memref<16x128xbf16, #tpu.memory_space<vmem>>, vector<16x128xbf16>
    %c0_1 = arith.constant 0 : index
    %c0_2 = arith.constant 0 : index
    %1 = vector.load %arg3[%c0_1, %c0_2] : memref<128x256xbf16, #tpu.memory_space<vmem>>, vector<128x256xbf16>
    %cst = arith.constant dense<0.000000e+00> : vector<16x256xf32>
    %2 = tpu.matmul %0, %1, %cst {dimension_numbers = #tpu.dot_dimension_numbers<[1], [0], [0], [1], [0, 0, 1, 1], [], []>} : vector<16x128xbf16>, vector<128x256xbf16>, vector<16x256xf32> -> vector<16x256xf32>
    %c0_3 = arith.constant 0 : index
    %c0_4 = arith.constant 0 : index
    %3 = vector.load %arg4[%c0_3, %c0_4] : memref<1x256xf32, #tpu.memory_space<vmem>>, vector<1x256xf32>
    %4 = vector.broadcast %3 : vector<1x256xf32> to vector<16x256xf32>
    %5 = arith.addf %2, %4 : vector<16x256xf32>
    %6 = vector.extract_strided_slice %5 {offsets = [0, 0], sizes = [16, 128], strides = [1, 1]} : vector<16x256xf32> to vector<16x128xf32>
    %7 = vector.extract_strided_slice %5 {offsets = [0, 128], sizes = [16, 128], strides = [1, 1]} : vector<16x256xf32> to vector<16x128xf32>
    %8 = arith.negf %7 : vector<16x128xf32>
    %9 = math.exp %8 : vector<16x128xf32>
    %cst_5 = arith.constant 1.000000e+00 : f32
    %10 = vector.broadcast %cst_5 : f32 to vector<16x128xf32>
    %11 = arith.addf %10, %9 : vector<16x128xf32>
    %12 = arith.divf %10, %11 : vector<16x128xf32>
    %13 = arith.mulf %6, %12 : vector<16x128xf32>
    %c0_6 = arith.constant 0 : index
    %c0_7 = arith.constant 0 : index
    %14 = vector.load %arg2[%c0_6, %c0_7] : memref<16x128xf32, #tpu.memory_space<vmem>>, vector<16x128xf32>
    %15 = arith.addf %13, %14 : vector<16x128xf32>
    %cst_8 = arith.constant dense<0.000000e+00> : vector<16xf32>
    %16 = vector.multi_reduction <add>, %15, %cst_8 [1] : vector<16x128xf32> to vector<16xf32>
    %17 = vector.shape_cast %16 : vector<16xf32> to vector<16x1xf32>
    %cst_9 = arith.constant 3.125000e-02 : f32
    %18 = vector.broadcast %cst_9 : f32 to vector<16x1xf32>
    %19 = arith.mulf %17, %18 : vector<16x1xf32>
    %20 = vector.broadcast %19 : vector<16x1xf32> to vector<16x128xf32>
    %21 = arith.subf %15, %20 : vector<16x128xf32>
    %22 = tpu.iota {dimensions = array<i32: 1>} : vector<16x128xi32>
    %c32_i32 = arith.constant 32 : i32
    %23 = vector.broadcast %c32_i32 : i32 to vector<16x128xi32>
    %24 = arith.cmpi slt, %22, %23 : vector<16x128xi32>
    %cst_10 = arith.constant 0.000000e+00 : f32
    %25 = vector.broadcast %cst_10 : f32 to vector<16x128xf32>
    %26 = arith.select %24, %21, %25 : vector<16x128xi1>, vector<16x128xf32>
    %27 = arith.mulf %26, %26 : vector<16x128xf32>
    %cst_11 = arith.constant dense<0.000000e+00> : vector<16xf32>
    %28 = vector.multi_reduction <add>, %27, %cst_11 [1] : vector<16x128xf32> to vector<16xf32>
    %29 = vector.shape_cast %28 : vector<16xf32> to vector<16x1xf32>
    %cst_12 = arith.constant 3.125000e-02 : f32
    %30 = vector.broadcast %cst_12 : f32 to vector<16x1xf32>
    %31 = arith.mulf %29, %30 : vector<16x1xf32>
    %cst_13 = arith.constant 9.99999974E-6 : f32
    %32 = vector.broadcast %cst_13 : f32 to vector<16x1xf32>
    %33 = arith.addf %31, %32 : vector<16x1xf32>
    %34 = math.rsqrt %33 : vector<16x1xf32>
    %35 = vector.broadcast %34 : vector<16x1xf32> to vector<16x128xf32>
    %36 = arith.mulf %26, %35 : vector<16x128xf32>
    %c0_14 = arith.constant 0 : index
    %c0_15 = arith.constant 0 : index
    %37 = vector.load %arg5[%c0_14, %c0_15] : memref<1x128xf32, #tpu.memory_space<vmem>>, vector<1x128xf32>
    %38 = vector.broadcast %37 : vector<1x128xf32> to vector<16x128xf32>
    %39 = arith.mulf %36, %38 : vector<16x128xf32>
    %c0_16 = arith.constant 0 : index
    %c0_17 = arith.constant 0 : index
    %40 = vector.load %arg6[%c0_16, %c0_17] : memref<1x128xf32, #tpu.memory_space<vmem>>, vector<1x128xf32>
    %41 = vector.broadcast %40 : vector<1x128xf32> to vector<16x128xf32>
    %42 = arith.addf %39, %41 : vector<16x128xf32>
    %c0_18 = arith.constant 0 : index
    %c0_19 = arith.constant 0 : index
    %43 = vector.load %arg7[%c0_18, %c0_19] : memref<16x128xf32, #tpu.memory_space<vmem>>, vector<16x128xf32>
    tpu.vector_store %arg7[%c0_18, %c0_19], %42 {strides = array<i32>} : memref<16x128xf32, #tpu.memory_space<vmem>>, vector<16x128xf32>,
    return
  }
  func.func @transform_0(%arg0: i32) -> (i32, i32) {
    %c0_i32 = arith.constant 0 : i32
    %c0_i32_0 = arith.constant 0 : i32
    return %arg0, %c0_i32 : i32, i32
  }
  func.func @transform_1(%arg0: i32) -> (i32, i32) {
    %c0_i32 = arith.constant 0 : i32
    %c0_i32_0 = arith.constant 0 : i32
    return %arg0, %c0_i32 : i32, i32
  }
  func.func @transform_2(%arg0: i32) -> (i32, i32) {
    %c0_i32 = arith.constant 0 : i32
    %c0_i32_0 = arith.constant 0 : i32
    %c0_i32_1 = arith.constant 0 : i32
    return %c0_i32, %c0_i32_0 : i32, i32
  }
  func.func @transform_3(%arg0: i32) -> (i32, i32) {
    %c0_i32 = arith.constant 0 : i32
    %c0_i32_0 = arith.constant 0 : i32
    %c0_i32_1 = arith.constant 0 : i32
    return %c0_i32, %c0_i32_0 : i32, i32
  }
  func.func @transform_4(%arg0: i32) -> (i32, i32) {
    %c0_i32 = arith.constant 0 : i32
    %c0_i32_0 = arith.constant 0 : i32
    %c0_i32_1 = arith.constant 0 : i32
    return %c0_i32, %c0_i32_0 : i32, i32
  }
  func.func @transform_5(%arg0: i32) -> (i32, i32) {
    %c0_i32 = arith.constant 0 : i32
    %c0_i32_0 = arith.constant 0 : i32
    %c0_i32_1 = arith.constant 0 : i32
    return %c0_i32, %c0_i32_0 : i32, i32
  }
  func.func @transform_6(%arg0: i32) -> (i32, i32) {
    %c0_i32 = arith.constant 0 : i32
    %c0_i32_0 = arith.constant 0 : i32
    return %arg0, %c0_i32 : i32, i32
  }
}

</mosaic_0001>

<llo_original>
// kernel: tpu_custom_call.1
$region0: #{tpu_custom_call.1}
  #allocation0 [shape = 'u32[]', space=smem, size = 0x4, offset = 0x4, fixed_abs, tag = 'smem constant byte address 0x4 - core index']
  #allocation1 [shape = 'u32[72,128]{1,0:T(1,128)}', space=vmem, size = 0x9000, scoped, tag = 'internal scratch']
  %s0 = inlined_call_operand.hbm [shape: bf16[16,128], index: 0, kind: input, shape index: {}]
  %s1 = inlined_call_operand.hbm [shape: f32[16,128], index: 1, kind: input, shape index: {}]
  %s2 = inlined_call_operand.hbm [shape: bf16[128,256], index: 2, kind: input, shape index: {}]
  %s3 = inlined_call_operand.vmem [shape: f32[1,256], index: 3, kind: input, shape index: {}]
  %s4 = inlined_call_operand.vmem [shape: f32[1,128], index: 4, kind: input, shape index: {}]
  %s5 = inlined_call_operand.vmem [shape: f32[1,128], index: 5, kind: input, shape index: {}]
  %s6 = inlined_call_operand.hbm [shape: f32[16,128], index: 6, kind: output, shape index: {}]
  %s7 = sld [smem:[#allocation0]]
  $region46: #{tpu_custom_call.1} parent=0
    _
  %s9 = ssub.s32 1, %s7
  %s10 = scalar_select 0, %s9, %s7
  $region1: #{tpu_custom_call.1} parent=0
    #allocation2 [shape = 'u8[4096]{0}', space=vmem, size = 0x1000, scoped, tag = 'input window, operand 0, single buffered']
    #allocation3 [shape = 's32[1]{0}', space=sflag, size = 0x4, scoped, tag = 'scoped memory for tpu_custom_call.1']
    #allocation4 [shape = 's32[1]{0}', space=sflag, size = 0x4, scoped, tag = 'scoped memory for tpu_custom_call.1']
    #allocation5 [shape = 'u8[8192]{0}', space=vmem, size = 0x2000, scoped, tag = 'input window, operand 1, single buffered']
    #allocation6 [shape = 's32[1]{0}', space=sflag, size = 0x4, scoped, tag = 'scoped memory for tpu_custom_call.1']
    #allocation7 [shape = 'u8[65536]{0}', space=vmem, size = 0x10000, scoped, tag = 'input window, operand 2, single buffered']
    #allocation8 [shape = 'u8[8192]{0}', space=vmem, size = 0x2000, scoped, tag = 'output window, operand 0, single buffered']
    %11 = vsyncpa [#allocation3], 0
    %12 = vsyncpa [#allocation6], 0
    %13 = vsyncpa [#allocation4], 0
    // Predicated region
    $region2: #{tpu_custom_call.1} parent=1 // pred_check
      _
    $region3: #{tpu_custom_call.1} parent=1 // pred_check_branch
      %15 = sbr.rel (0) target = $region5
    $region4: #{tpu_custom_call.1} parent=1 // pred_region
      %17 = vsyncadd [#allocation3], 0
      %s18 = sshll.u32 %s0, 4
      %s19 = int_to_ptr.hbm [resolvable:$true] %s18
      %s20 = sshll.u32 [#allocation2], 4
      %s21 = int_to_ptr.vmem [resolvable:$true] %s20
      %26 = dma.hbm_to_vmem [thread:$0]  %s19, 128, %s21, [#allocation3], 64, 64, 4
    $region5: #{tpu_custom_call.1} parent=1 // pred_fallthru
      _
    // Predicated region
    $region6: #{tpu_custom_call.1} parent=1 // pred_check
      _
    $region7: #{tpu_custom_call.1} parent=1 // pred_check_branch
      %28 = sbr.rel (0) target = $region9
    $region8: #{tpu_custom_call.1} parent=1 // pred_region
      %30 = vsyncadd [#allocation6], 0
      %s31 = sshll.u32 %s1, 4
      %s32 = int_to_ptr.hbm [resolvable:$true] %s31
      %s33 = sshll.u32 [#allocation5], 4
      %s34 = int_to_ptr.vmem [resolvable:$true] %s33
      %39 = dma.hbm_to_vmem [thread:$0]  %s32, 256, %s34, [#allocation6], 128, 128, 8
    $region9: #{tpu_custom_call.1} parent=1 // pred_fallthru
      _
    // Predicated region
    $region10: #{tpu_custom_call.1} parent=1 // pred_check
      _
    $region11: #{tpu_custom_call.1} parent=1 // pred_check_branch
      %41 = sbr.rel (0) target = $region13
    $region12: #{tpu_custom_call.1} parent=1 // pred_region
      %43 = vsyncadd [#allocation6], 0
      %s44 = sshll.u32 %s2, 4
      %s45 = int_to_ptr.hbm [resolvable:$true] %s44
      %s46 = sshll.u32 [#allocation7], 4
      %s47 = int_to_ptr.vmem [resolvable:$true] %s46
      %52 = dma.hbm_to_vmem [thread:$0]  %s45, 2048, %s47, [#allocation6], 128, 128, 8
    $region13: #{tpu_custom_call.1} parent=1 // pred_fallthru
      _
    // Predicated region
    $region14: #{tpu_custom_call.1} parent=1 // pred_check
      _
    $region15: #{tpu_custom_call.1} parent=1 // pred_check_branch
      %54 = sbr.rel (0) target = $region17
    $region16: #{tpu_custom_call.1} parent=1 // pred_region
      _
    $region17: #{tpu_custom_call.1} parent=1 // pred_fallthru
      _
    // Predicated region
    $region18: #{tpu_custom_call.1} parent=1 // pred_check
      _
    $region19: #{tpu_custom_call.1} parent=1 // pred_check_branch
      %56 = sbr.rel (0) target = $region21
    $region20: #{tpu_custom_call.1} parent=1 // pred_region
      _
    $region21: #{tpu_custom_call.1} parent=1 // pred_fallthru
      _
    // Predicated region
    $region22: #{tpu_custom_call.1} parent=1 // pred_check
      _
    $region23: #{tpu_custom_call.1} parent=1 // pred_check_branch
      %58 = sbr.rel (0) target = $region25
    $region24: #{tpu_custom_call.1} parent=1 // pred_region
      _
    $region25: #{tpu_custom_call.1} parent=1 // pred_fallthru
      _
    // Predicated region
    $region26: #{tpu_custom_call.1} parent=1 // pred_check
      _
    $region27: #{tpu_custom_call.1} parent=1 // pred_check_branch
      %60 = sbr.rel (0) target = $region29
    $region28: #{tpu_custom_call.1} parent=1 // pred_region
      %62 = dma.done [#allocation3], 128
    $region29: #{tpu_custom_call.1} parent=1 // pred_fallthru
      _
    // Predicated region
    $region30: #{tpu_custom_call.1} parent=1 // pred_check
      _
    $region31: #{tpu_custom_call.1} parent=1 // pred_check_branch
      %64 = sbr.rel (0) target = $region33
    $region32: #{tpu_custom_call.1} parent=1 // pred_region
      %66 = dma.done [#allocation6], 256
    $region33: #{tpu_custom_call.1} parent=1 // pred_fallthru
      _
    // Predicated region
    $region34: #{tpu_custom_call.1} parent=1 // pred_check
      _
    $region35: #{tpu_custom_call.1} parent=1 // pred_check_branch
      %68 = sbr.rel (0) target = $region37
    $region36: #{tpu_custom_call.1} parent=1 // pred_region
      %70 = dma.done [#allocation6], 2048
    $region37: #{tpu_custom_call.1} parent=1 // pred_fallthru
      _
    %v71 = vld [vmem:[#allocation2] sm:$0xf]
    %v72 = vld [vmem:[#allocation2 + $0x4] sm:$0xf]
    %v73 = vld [vmem:[#allocation7] sm:$0xff]
    %v74 = vld [vmem:[#allocation7 + $0x8] sm:$0xff]
    %v75 = vld [vmem:[#allocation7 + $0x10] sm:$0xff]
    %v76 = vld [vmem:[#allocation7 + $0x18] sm:$0xff]
    %v77 = vld [vmem:[#allocation7 + $0x20] sm:$0xff]
    %v78 = vld [vmem:[#allocation7 + $0x28] sm:$0xff]
    %v79 = vld [vmem:[#allocation7 + $0x30] sm:$0xff]
    %v80 = vld [vmem:[#allocation7 + $0x38] sm:$0xff]
    %v81 = vld [vmem:[#allocation7 + $0x40] sm:$0xff]
    %v82 = vld [vmem:[#allocation7 + $0x48] sm:$0xff]
    %v83 = vld [vmem:[#allocation7 + $0x50] sm:$0xff]
    %v84 = vld [vmem:[#allocation7 + $0x58] sm:$0xff]
    %v85 = vld [vmem:[#allocation7 + $0x60] sm:$0xff]
    %v86 = vld [vmem:[#allocation7 + $0x68] sm:$0xff]
    %v87 = vld [vmem:[#allocation7 + $0x70] sm:$0xff]
    %v88 = vld [vmem:[#allocation7 + $0x78] sm:$0xff]
    %v89 = vld [vmem:[%s3] sm:$0x3]
    %v91 = vperm.slane %v89, 0
    %v92 = vperm.slane %v89, 1
    %v97 = vunpack.c.l.b16 %v71
    %v98 = vunpack.c.l.b16 %v72
    %v99 = vpack.c.b16 %v98, %v97
    %v117 = vunpack.c.l.b16 %v73
    %v118 = vunpack.c.h.b16 %v73
    %v119 = vunpack.c.l.b16 %v74
    %v120 = vunpack.c.h.b16 %v74
    %v121 = vunpack.c.l.b16 %v75
    %v122 = vunpack.c.h.b16 %v75
    %v123 = vunpack.c.l.b16 %v76
    %v124 = vunpack.c.h.b16 %v76
    %v125 = vunpack.c.l.b16 %v77
    %v126 = vunpack.c.h.b16 %v77
    %v127 = vunpack.c.l.b16 %v78
    %v128 = vunpack.c.h.b16 %v78
    %v129 = vunpack.c.l.b16 %v79
    %v130 = vunpack.c.h.b16 %v79
    %v131 = vunpack.c.l.b16 %v80
    %v132 = vunpack.c.h.b16 %v80
    %v133 = vunpack.c.l.b16 %v81
    %v134 = vunpack.c.h.b16 %v81
    %v135 = vunpack.c.l.b16 %v82
    %v136 = vunpack.c.h.b16 %v82
    %v137 = vunpack.c.l.b16 %v83
    %v138 = vunpack.c.h.b16 %v83
    %v139 = vunpack.c.l.b16 %v84
    %v140 = vunpack.c.h.b16 %v84
    %v141 = vunpack.c.l.b16 %v85
    %v142 = vunpack.c.h.b16 %v85
    %v143 = vunpack.c.l.b16 %v86
    %v144 = vunpack.c.h.b16 %v86
    %v145 = vunpack.c.l.b16 %v87
    %v146 = vunpack.c.h.b16 %v87
    %v147 = vunpack.c.l.b16 %v88
    %v148 = vunpack.c.h.b16 %v88
    %v149 = vpack.c.b16 %v119, %v117
    %v150 = vpack.c.b16 %v120, %v118
    %v151 = vpack.c.b16 %v123, %v121
    %v152 = vpack.c.b16 %v124, %v122
    %v153 = vpack.c.b16 %v127, %v125
    %v154 = vpack.c.b16 %v128, %v126
    %v155 = vpack.c.b16 %v131, %v129
    %v156 = vpack.c.b16 %v132, %v130
    %v157 = vpack.c.b16 %v135, %v133
    %v158 = vpack.c.b16 %v136, %v134
    %v159 = vpack.c.b16 %v139, %v137
    %v160 = vpack.c.b16 %v140, %v138
    %v161 = vpack.c.b16 %v143, %v141
    %v162 = vpack.c.b16 %v144, %v142
    %v163 = vpack.c.b16 %v147, %v145
    %v164 = vpack.c.b16 %v148, %v146
    %181 = vmatpush.bf16.msra.mxu0 %v163
    %182 = vmatpush.bf16.msra.mxu0 %v161
    %183 = vmatpush.bf16.msra.mxu0 %v159
    %184 = vmatpush.bf16.msra.mxu0 %v157
    %185 = vmatpush.bf16.msra.mxu0 %v155
    %186 = vmatpush.bf16.msra.mxu0 %v153
    %187 = vmatpush.bf16.msra.mxu0 %v151
    %188 = vmatpush.bf16.msra.mxu0 %v149
    %189 = vmatmul.bf16.gmra.mxu0 %v99
    %v190 = vpop.f32.mrf.mxu0
    %v191 = vadd.f32 %v91, %v190
    %v192 = vpop.f32.mrf.mxu0
    %v193 = vadd.f32 %v91, %v192
    %194 = vdwg.mxu0
    %195 = vmatpush.bf16.msra.mxu0 %v164
    %196 = vmatpush.bf16.msra.mxu0 %v162
    %197 = vmatpush.bf16.msra.mxu0 %v160
    %198 = vmatpush.bf16.msra.mxu0 %v158
    %199 = vmatpush.bf16.msra.mxu0 %v156
    %200 = vmatpush.bf16.msra.mxu0 %v154
    %201 = vmatpush.bf16.msra.mxu0 %v152
    %202 = vmatpush.bf16.msra.mxu0 %v150
    %203 = vmatmul.bf16.gmra.mxu0 %v99
    %v204 = vpop.f32.mrf.mxu0
    %v205 = vadd.f32 %v92, %v204
    %v206 = vpop.f32.mrf.mxu0
    %v207 = vadd.f32 %v92, %v206
    %208 = vdwg.mxu0
    %v209 = vxor.u32 %v205, 2147483648
    %v210 = vxor.u32 %v207, 2147483648
    %v211 = vmul.f32 %v209, 1.442695
    %v212 = vpow.pop %v211
    %v213 = vmul.f32 %v210, 1.442695
    %v214 = vpow.pop %v213
    %v215 = vadd.f32 %v212, 1.0
    %v216 = vadd.f32 %v214, 1.0
    %v217 = vrcp.pop %v215
    %v218 = vmul.f32 %v215, %v217
    %v219 = vsub.f32 1.0, %v218
    %v220 = vmul.f32 %v217, %v219
    %v221 = vadd.f32 %v217, %v220
    %vm222 = vweird.f32 %v215
    %vm223 = vweird.f32 %v217
    %vm224 = vmor %vm222, %vm223
    %v225 = vsel %vm224, %v217, %v221
    %v226 = vand.u32 2147483647, %v215
    %vm227 = vcmp.eq.f32.partialorder %v226, 8.507059e+37
    %v228 = vand.u32 %v215, 2147483648
    %v229 = vor.u32 1.1754944e-38, %v228
    %v230 = vsel %vm227, %v229, %v225
    %v231 = vmul.f32 1.0, %v230
    %v232 = vrcp.pop %v216
    %v233 = vmul.f32 %v216, %v232
    %v234 = vsub.f32 1.0, %v233
    %v235 = vmul.f32 %v232, %v234
    %v236 = vadd.f32 %v232, %v235
    %vm237 = vweird.f32 %v216
    %vm238 = vweird.f32 %v232
    %vm239 = vmor %vm237, %vm238
    %v240 = vsel %vm239, %v232, %v236
    %v241 = vand.u32 2147483647, %v216
    %vm242 = vcmp.eq.f32.partialorder %v241, 8.507059e+37
    %v243 = vand.u32 %v216, 2147483648
    %v244 = vor.u32 1.1754944e-38, %v243
    %v245 = vsel %vm242, %v244, %v240
    %v246 = vmul.f32 1.0, %v245
    %v247 = vmul.f32 %v191, %v231
    %v248 = vmul.f32 %v193, %v246
    %v249 = vld [vmem:[#allocation5] sm:$0xff]
    %v250 = vld [vmem:[#allocation5 + $0x8] sm:$0xff]
    %v251 = vadd.f32 %v247, %v249
    %v252 = vadd.f32 %v248, %v250
    %253 = vadd.xlane.f32.xlu0 %v251
    %v254 = vpop.xlane.xlu0 %253
    %255 = vadd.xlane.f32.xlu0 %v252
    %v256 = vpop.xlane.xlu0 %255
    %v257 = vmul.f32 %v254, 0.03125
    %v258 = vmul.f32 %v256, 0.03125
    %v259 = vsub.f32 %v251, %v257
    %v260 = vsub.f32 %v252, %v258
    %v261 = vlaneseq
    %v262 = vand.u32 %v261, 127
    %vm263 = vcmp.lt.s32.totalorder %v262, 32
    %v264 = vsel %vm263, %v259, 0.0
    %v265 = vsel %vm263, %v260, 0.0
    %v266 = vmul.f32 %v264, %v264
    %v267 = vmul.f32 %v265, %v265
    %268 = vadd.xlane.f32.xlu0 %v266
    %v269 = vpop.xlane.xlu0 %268
    %270 = vadd.xlane.f32.xlu0 %v267
    %v271 = vpop.xlane.xlu0 %270
    %v272 = vmul.f32 %v269, 0.03125
    %v273 = vmul.f32 %v271, 0.03125
    %v274 = vadd.f32 %v272, 1e-05
    %v275 = vadd.f32 %v273, 1e-05
    %v276 = vrsqrt.pop %v274
    %v277 = vmul.f32 %v276, %v274
    %v278 = vmul.f32 %v277, %v276
    %v279 = vmul.f32 0.5, %v278
    %v280 = vsub.f32 1.5, %v279
    %v281 = vmul.f32 %v276, %v280
    %vm282 = vweird.f32 %v274
    %vm283 = vweird.f32 %v276
    %vm284 = vmor %vm282, %vm283
    %v285 = vsel %vm284, %v276, %v281
    %v286 = vrsqrt.pop %v275
    %v287 = vmul.f32 %v286, %v275
    %v288 = vmul.f32 %v287, %v286
    %v289 = vmul.f32 0.5, %v288
    %v290 = vsub.f32 1.5, %v289
    %v291 = vmul.f32 %v286, %v290
    %vm292 = vweird.f32 %v275
    %vm293 = vweird.f32 %v286
    %vm294 = vmor %vm292, %vm293
    %v295 = vsel %vm294, %v286, %v291
    %v296 = vmul.f32 %v264, %v285
    %v297 = vmul.f32 %v265, %v295
    %v298 = vld [vmem:[%s4] sm:$0x1]
    %v300 = vperm.slane %v298, 0
    %v302 = vmul.f32 %v296, %v300
    %v303 = vmul.f32 %v297, %v300
    %v304 = vld [vmem:[%s5] sm:$0x1]
    %v306 = vperm.slane %v304, 0
    %v308 = vadd.f32 %v302, %v306
    %v309 = vadd.f32 %v303, %v306
    %310 = vst [vmem:[#allocation8] sm:$0xff] %v308
    %311 = vst [vmem:[#allocation8 + $0x8] sm:$0xff] %v309
    // Predicated region
    $region38: #{tpu_custom_call.1} parent=1 // pred_check
      _
    $region39: #{tpu_custom_call.1} parent=1 // pred_check_branch
      %313 = sbr.rel (0) target = $region41
    $region40: #{tpu_custom_call.1} parent=1 // pred_region
      %315 = vsyncadd [#allocation4], 0
      %s316 = sshll.u32 [#allocation8], 4
      %s317 = int_to_ptr.vmem [resolvable:$true] %s316
      %s318 = sshll.u32 %s6, 4
      %s319 = int_to_ptr.hbm [resolvable:$true] %s318
      %324 = dma.vmem_to_hbm [thread:$0]  %s317, 256, %s319, [#allocation4], 128, 128, 8
    $region41: #{tpu_custom_call.1} parent=1 // pred_fallthru
      _
    // Predicated region
    $region42: #{tpu_custom_call.1} parent=1 // pred_check
      _
    $region43: #{tpu_custom_call.1} parent=1 // pred_check_branch
      %326 = sbr.rel (0) target = $region45
    $region44: #{tpu_custom_call.1} parent=1 // pred_region
      %328 = dma.done [#allocation4], 256
    $region45: #{tpu_custom_call.1} parent=1 // pred_fallthru
      _
    %329 = vsyncpa [#allocation3], 1
    %330 = vsyncpa [#allocation6], 1
    %331 = vsyncpa [#allocation4], 1

</llo_original>
